<compile_context>
chip_gen: v6e
topology: v6e:2x2x1
jax: 0.10.0
libtpu: 0.0.40
codegen_flags: <defaults>
</compile_context>

<pallas_src>
import jax
import jax.numpy as jnp
from jax.experimental import pallas as pl
from jax.experimental.pallas import tpu as pltpu


N_PAD = 16                     # padded head width: 11 real logits + 5 zero columns
_PALLAS_MIN_BATCH = 2048       # below this (at small D) plain XLA dot is cheaper
# Conservative budget: fits v5e's 16 MiB scoped-VMEM default and stays well
# under v7x's 32 MiB scoped default / 64 MiB physical VMEM (do NOT raise this
# to "use" v6e's 128 MiB -- it would regress on v7x).
_VMEM_BUDGET_BYTES = 12 * 1024 * 1024
_TARGET_GRID_STEPS = 8         # >= 4 pipelined steps per TensorCore on v7x


def _round_up(n, m):
    return (n + m - 1) // m * m


def _pick_tile_b(b, d, x_itemsize, out_itemsize, align):
    """Largest batch tile (multiple of `align`, <= 2048) that fits the VMEM
    budget while keeping roughly _TARGET_GRID_STEPS grid steps for large B."""
    # VMEM-limited cap.  Count BOTH pipeline buffers of every operand,
    # including the grid-invariant weight/bias blocks (Pallas still
    # double-buffers them).
    tb = 2048
    while tb > align:
        x_bytes = 2 * tb * d * x_itemsize            # double-buffered x tiles
        o_bytes = 2 * tb * N_PAD * out_itemsize      # double-buffered out tiles
        w_bytes = 2 * (d * N_PAD * 4 + N_PAD * 4)    # double-buffered w + bias (f32)
        if x_bytes + o_bytes + w_bytes <= _VMEM_BUDGET_BYTES:
            break
        tb //= 2
    tb = max(align, tb)
    # Step-count cap: keep ~_TARGET_GRID_STEPS steps so megacore sharding on
    # v7x still leaves several pipelined iterations per core.
    per_step = (b + _TARGET_GRID_STEPS - 1) // _TARGET_GRID_STEPS
    tb_steps = max(align, _round_up(per_step, align))
    tb = min(tb, tb_steps)
    # Never larger than the (aligned) batch itself.
    tb = min(tb, max(align, _round_up(b, align)))
    return tb


def _multihead_fc_kernel(x_ref, w_ref, b_ref, o_ref):
    # x_ref: [TB, D], w_ref: [D, 16] (grid-invariant), b_ref: [1, 16], o_ref: [TB, 16]
    acc = jnp.dot(x_ref[...], w_ref[...], preferred_element_type=jnp.float32)
    o_ref[...] = (acc + b_ref[...]).astype(o_ref.dtype)


def multihead_fc_pallas(x, w_pad, b_pad, out_dtype=None):
    """x: [B, D] (f32 or bf16), w_pad: [D, 16] f32, b_pad: [1, 16] f32 -> [B, 16]."""
    B, D = x.shape
    Np = w_pad.shape[1]
    out_dtype = jnp.dtype(out_dtype) if out_dtype is not None else x.dtype

    # bf16 packs two rows per sublane -> minimum (16, 128) tile; f32 needs 8.
    align = 16 if x.dtype == jnp.bfloat16 or out_dtype == jnp.bfloat16 else 8
    tb = _pick_tile_b(B, D, x.dtype.itemsize, jnp.dtype(out_dtype).itemsize, align)
    grid = (pl.cdiv(B, tb),)

    cost = pl.CostEstimate(
        flops=2 * B * D * Np,
        transcendentals=0,
        bytes_accessed=(B * D * x.dtype.itemsize
                        + D * Np * w_pad.dtype.itemsize
                        + Np * 4
                        + B * Np * jnp.dtype(out_dtype).itemsize),
    )

    return pl.pallas_call(
        _multihead_fc_kernel,
        out_shape=jax.ShapeDtypeStruct((B, Np), out_dtype),
        grid_spec=pltpu.PrefetchScalarGridSpec(
            num_scalar_prefetch=0,
            grid=grid,
            in_specs=[
                pl.BlockSpec((tb, D), lambda i: (i, 0)),   # x: tiled over batch
                pl.BlockSpec((D, Np), lambda i: (0, 0)),   # weights: grid-invariant
                pl.BlockSpec((1, Np), lambda i: (0, 0)),   # bias: grid-invariant
            ],
            out_specs=pl.BlockSpec((tb, Np), lambda i: (i, 0)),
        ),
        compiler_params=pltpu.CompilerParams(
            dimension_semantics=("parallel",),   # lets v7x shard the batch over 2 TCs
        ),
        cost_estimate=cost,
    )(x, w_pad, b_pad)


class MultiClassFcPallas:
    """Deterministic re-implementation of MultiClassFc with a Pallas matmul kernel."""

    HEAD_SIZES = (3, 2, 6)  # mask, gender, age
    N_TOTAL = sum(HEAD_SIZES)

    def __init__(self, backbone_dim, key, out_dtype=None):
        self.backbone_dim = backbone_dim
        self.out_dtype = jnp.dtype(out_dtype) if out_dtype is not None else None
        bound = 1.0 / (backbone_dim ** 0.5)  # matches nn.Linear default init range
        ws, bs = [], []
        for i, n in enumerate(self.HEAD_SIZES):
            kw, kb = jax.random.split(jax.random.fold_in(key, i))
            # PyTorch Linear weight is [out, in]; store transposed [in, out].
            w = jax.random.uniform(kw, (backbone_dim, n), jnp.float32, -bound, bound)
            b = jax.random.uniform(kb, (n,), jnp.float32, -bound, bound)
            ws.append(w)
            bs.append(b)
        self.w_cat = jnp.concatenate(ws, axis=1)   # [D, 11] (exact, for fallback/ref)
        self.b_cat = jnp.concatenate(bs, axis=0)   # [11]
        # Narrow padded parameters for the Pallas path (zero columns are free).
        self.w_pad = jnp.pad(self.w_cat, ((0, 0), (0, N_PAD - self.N_TOTAL)))           # [D, 16]
        self.b_pad = jnp.pad(self.b_cat, (0, N_PAD - self.N_TOTAL)).reshape(1, N_PAD)   # [1, 16]

    def _split_heads(self, y):
        n0, n1, n2 = self.HEAD_SIZES
        return (y[:, :n0], y[:, n0:n0 + n1], y[:, n0 + n1:n0 + n1 + n2])

    def __call__(self, x):
        # NOTE: callers should jit around this call so the head slices fuse
        # with the pallas_call output instead of re-reading HBM.
        B = x.shape[0]
        out_dtype = self.out_dtype if self.out_dtype is not None else x.dtype
        if B < _PALLAS_MIN_BATCH:
            # Tiny/medium problem: launch overhead would dominate; plain XLA wins.
            y = (x @ self.w_cat + self.b_cat).astype(out_dtype)
            return self._split_heads(y)
        y = multihead_fc_pallas(x, self.w_pad, self.b_pad, out_dtype=out_dtype)  # [B, 16]
        return self._split_heads(y[:, :self.N_TOTAL])


if __name__ == "__main__":
    key = jax.random.PRNGKey(0)
    kx, kp, kb, kr = jax.random.split(key, 4)

    D = 32  # small backbone_dim for the test
    model = MultiClassFcPallas(D, kp)

    # ---- small shape (batch=2): run the Pallas kernel directly --------------
    x_small = jax.random.normal(kx, (2, D), jnp.float32)
    y_pallas_small = multihead_fc_pallas(x_small, model.w_pad, model.b_pad)
    jax.block_until_ready(y_pallas_small)
    y_ref_small = x_small @ model.w_cat + model.b_cat
    assert y_pallas_small.shape == (2, N_PAD)
    assert jnp.allclose(y_pallas_small[:, :11], y_ref_small, atol=1e-5, rtol=1e-5)

    # ---- module dispatch at batch=2 (XLA fallback path) ---------------------
    mask_s, gender_s, age_s = model(x_small)
    jax.block_until_ready((mask_s, gender_s, age_s))
    assert mask_s.shape == (2, 3) and gender_s.shape == (2, 2) and age_s.shape == (2, 6)
    for got, want in zip((mask_s, gender_s, age_s),
                         (y_ref_small[:, :3], y_ref_small[:, 3:5], y_ref_small[:, 5:11])):
        assert jnp.allclose(got, want, atol=1e-5, rtol=1e-5)

    # ---- ragged batch through the Pallas path (OOB-masked tail block) -------
    B_rag = 1030
    x_rag = jax.random.normal(kb, (B_rag, D), jnp.float32)
    y_rag = multihead_fc_pallas(x_rag, model.w_pad, model.b_pad)
    jax.block_until_ready(y_rag)
    y_rag_ref = x_rag @ model.w_cat + model.b_cat
    assert y_rag.shape == (B_rag, N_PAD)
    assert jnp.allclose(y_rag[:, :11], y_rag_ref, atol=1e-4, rtol=1e-4)

    # ---- large batch through the module (tiled, pipelined Pallas path) ------
    B = 4096
    x_big = jax.random.normal(kr, (B, D), jnp.float32)
    mask_o, gender_o, age_o = model(x_big)
    jax.block_until_ready((mask_o, gender_o, age_o))
    assert mask_o.shape == (B, 3) and gender_o.shape == (B, 2) and age_o.shape == (B, 6)
    y_ref = x_big @ model.w_cat + model.b_cat
    for got, want in zip((mask_o, gender_o, age_o),
                         (y_ref[:, :3], y_ref[:, 3:5], y_ref[:, 5:11])):
        assert jnp.allclose(got, want, atol=1e-4, rtol=1e-4)

    # ---- bf16 output + caller-provided bf16 activations (halved HBM traffic) -
    model_bf16 = MultiClassFcPallas(D, kp, out_dtype=jnp.bfloat16)
    x_big_bf16 = x_big.astype(jnp.bfloat16)   # caller-side activation dtype choice
    mask_b, gender_b, age_b = model_bf16(x_big_bf16)
    jax.block_until_ready((mask_b, gender_b, age_b))
    assert mask_b.dtype == jnp.bfloat16
    for got, want in zip((mask_b, gender_b, age_b),
                         (y_ref[:, :3], y_ref[:, 3:5], y_ref[:, 5:11])):
        assert jnp.allclose(got.astype(jnp.float32), want, atol=5e-2, rtol=5e-2)

    print("KERNEL_OK")
</pallas_src>

<mosaic_0001>
module attributes {stable_mosaic.version = 11 : i64} {
  func.func @_multihead_fc_kernel(%arg0: i32, %arg1: memref<8x32xf32, #tpu.memory_space<vmem>>, %arg2: memref<32x16xf32, #tpu.memory_space<vmem>>, %arg3: memref<1x16xf32, #tpu.memory_space<vmem>>, %arg4: memref<8x16xf32, #tpu.memory_space<vmem>>) attributes {dimension_semantics = [#tpu.dimension_semantics<parallel>], iteration_bounds = array<i64: 1>, scalar_prefetch = 0 : i64, scratch_operands = 0 : i64, tpu.core_type = #tpu.core_type<tc>, window_params = [{transform_indices = @transform_0, window_bounds = array<i64: 8, 32>}, {pipeline_mode = #tpu.pipeline_mode<synchronous>, transform_indices = @transform_1, window_bounds = array<i64: 32, 16>}, {pipeline_mode = #tpu.pipeline_mode<synchronous>, transform_indices = @transform_2, window_bounds = array<i64: 1, 16>}, {transform_indices = @transform_3, window_bounds = array<i64: 8, 16>}]} {
    %c0 = arith.constant 0 : index
    %c0_0 = arith.constant 0 : index
    %0 = vector.load %arg1[%c0, %c0_0] : memref<8x32xf32, #tpu.memory_space<vmem>>, vector<8x32xf32>
    %c0_1 = arith.constant 0 : index
    %c0_2 = arith.constant 0 : index
    %1 = vector.load %arg2[%c0_1, %c0_2] : memref<32x16xf32, #tpu.memory_space<vmem>>, vector<32x16xf32>
    %cst = arith.constant dense<0.000000e+00> : vector<8x16xf32>
    %2 = tpu.matmul %0, %1, %cst {dimension_numbers = #tpu.dot_dimension_numbers<[1], [0], [0], [1], [0, 0, 1, 1], [], []>} : vector<8x32xf32>, vector<32x16xf32>, vector<8x16xf32> -> vector<8x16xf32>
    %c0_3 = arith.constant 0 : index
    %c0_4 = arith.constant 0 : index
    %3 = vector.load %arg3[%c0_3, %c0_4] : memref<1x16xf32, #tpu.memory_space<vmem>>, vector<1x16xf32>
    %4 = vector.broadcast %3 : vector<1x16xf32> to vector<8x16xf32>
    %5 = arith.addf %2, %4 : vector<8x16xf32>
    %c0_5 = arith.constant 0 : index
    %c0_6 = arith.constant 0 : index
    %6 = vector.load %arg4[%c0_5, %c0_6] : memref<8x16xf32, #tpu.memory_space<vmem>>, vector<8x16xf32>
    tpu.vector_store %arg4[%c0_5, %c0_6], %5 {strides = array<i32>} : memref<8x16xf32, #tpu.memory_space<vmem>>, vector<8x16xf32>,
    return
  }
  func.func @transform_0(%arg0: i32) -> (i32, i32) {
    %c0_i32 = arith.constant 0 : i32
    %c0_i32_0 = arith.constant 0 : i32
    return %arg0, %c0_i32 : i32, i32
  }
  func.func @transform_1(%arg0: i32) -> (i32, i32) {
    %c0_i32 = arith.constant 0 : i32
    %c0_i32_0 = arith.constant 0 : i32
    %c0_i32_1 = arith.constant 0 : i32
    return %c0_i32, %c0_i32_0 : i32, i32
  }
  func.func @transform_2(%arg0: i32) -> (i32, i32) {
    %c0_i32 = arith.constant 0 : i32
    %c0_i32_0 = arith.constant 0 : i32
    %c0_i32_1 = arith.constant 0 : i32
    return %c0_i32, %c0_i32_0 : i32, i32
  }
  func.func @transform_3(%arg0: i32) -> (i32, i32) {
    %c0_i32 = arith.constant 0 : i32
    %c0_i32_0 = arith.constant 0 : i32
    return %arg0, %c0_i32 : i32, i32
  }
}

</mosaic_0001>

<llo_original>
// kernel: tpu_custom_call.1
$region0: #{tpu_custom_call.1}
  #allocation0 [shape = 'u32[]', space=smem, size = 0x4, offset = 0x4, fixed_abs, tag = 'smem constant byte address 0x4 - core index']
  #allocation1 [shape = 'u32[144,128]{1,0:T(1,128)}', space=vmem, size = 0x12000, scoped, tag = 'internal scratch']
  %s0 = inlined_call_operand.vmem [shape: f32[2,32], index: 0, kind: input, shape index: {}]
  %s1 = inlined_call_operand.vmem [shape: f32[32,16], index: 1, kind: input, shape index: {}]
  %s2 = inlined_call_operand.vmem [shape: f32[1,16], index: 2, kind: input, shape index: {}]
  %s3 = inlined_call_operand.hbm [shape: f32[2,16], index: 3, kind: output, shape index: {}]
  %s4 = sld [smem:[#allocation0]]
  $region22: #{tpu_custom_call.1} parent=0
    _
  %s6 = ssub.s32 1, %s4
  %s7 = scalar_select 0, %s6, %s4
  $region1: #{tpu_custom_call.1} parent=0
    #allocation2 [shape = 'u8[4096]{0}', space=vmem, size = 0x1000, scoped, tag = 'output window, operand 0, single buffered']
    #allocation3 [shape = 's32[1]{0}', space=sflag, size = 0x4, scoped, tag = 'scoped memory for tpu_custom_call.1']
    %8 = vsyncpa [#allocation3], 0
    // Predicated region
    $region2: #{tpu_custom_call.1} parent=1 // pred_check
      _
    $region3: #{tpu_custom_call.1} parent=1 // pred_check_branch
      %10 = sbr.rel (0) target = $region5
    $region4: #{tpu_custom_call.1} parent=1 // pred_region
      _
    $region5: #{tpu_custom_call.1} parent=1 // pred_fallthru
      _
    // Predicated region
    $region6: #{tpu_custom_call.1} parent=1 // pred_check
      _
    $region7: #{tpu_custom_call.1} parent=1 // pred_check_branch
      %12 = sbr.rel (0) target = $region9
    $region8: #{tpu_custom_call.1} parent=1 // pred_region
      _
    $region9: #{tpu_custom_call.1} parent=1 // pred_fallthru
      _
    // Predicated region
    $region10: #{tpu_custom_call.1} parent=1 // pred_check
      _
    $region11: #{tpu_custom_call.1} parent=1 // pred_check_branch
      %14 = sbr.rel (0) target = $region13
    $region12: #{tpu_custom_call.1} parent=1 // pred_region
      _
    $region13: #{tpu_custom_call.1} parent=1 // pred_fallthru
      _
    %v15 = vld [vmem:[%s0] sm:$0xff]
    %v16 = vld [vmem:[%s1] sm:$0xff]
    %v17 = vld [vmem:[%s1 + $0x8] sm:$0xff]
    %v18 = vld [vmem:[%s1 + $0x10] sm:$0xff]
    %v19 = vld [vmem:[%s1 + $0x18] sm:$0xff]
    %v20 = vld [vmem:[%s2] sm:$0x1]
    %v22 = vlaneseq
    %v23 = vshrl.u32 %v22, 7
    %v24 = vsub.s32 0, %v23
    %v25 = vrot.slane %v20, %v24
    %vm27 = vcmask 261120
    %v29 = vsel %vm27, %v15, 0
    %31 = vmatprep.subr.mxu0 0.0
    %32 = vmatpush1.msra.mxu0 0.0
    %33 = vmatprep.subr.mxu0 0.0
    %34 = vmatpush1.msra.mxu0 0.0
    %35 = vmatprep.subr.mxu0 0.0
    %36 = vmatpush1.msra.mxu0 0.0
    %37 = vmatprep.subr.mxu0 0.0
    %38 = vmatpush1.msra.mxu0 0.0
    %39 = vmatprep.subr.mxu0 0.0
    %40 = vmatpush1.msra.mxu0 0.0
    %41 = vmatprep.subr.mxu0 0.0
    %42 = vmatpush1.msra.mxu0 0.0
    %43 = vmatprep.subr.mxu0 0.0
    %44 = vmatpush1.msra.mxu0 0.0
    %45 = vmatprep.subr.mxu0 0.0
    %46 = vmatpush1.msra.mxu0 0.0
    %47 = vmatprep.subr.mxu0 0.0
    %48 = vmatpush1.msra.mxu0 0.0
    %49 = vmatprep.subr.mxu0 0.0
    %50 = vmatpush1.msra.mxu0 0.0
    %51 = vmatprep.subr.mxu0 0.0
    %52 = vmatpush1.msra.mxu0 0.0
    %53 = vmatprep.subr.mxu0 0.0
    %54 = vmatpush1.msra.mxu0 0.0
    %55 = vmatprep.subr.mxu0 0.0
    %56 = vmatpush1.msra.mxu0 %v19
    %57 = vmatprep.subr.mxu0 0.0
    %58 = vmatpush1.msra.mxu0 %v18
    %59 = vmatprep.subr.mxu0 0.0
    %60 = vmatpush1.msra.mxu0 %v17
    %61 = vmatprep.subr.mxu0 0.0
    %62 = vmatpush1.msra.mxu0 %v16
    %63 = vmatprep.subr.mxu0 0.0
    %64 = vmatpush2.msra.mxu0 0.0
    %65 = vmatprep.subr.mxu0 0.0
    %66 = vmatpush2.msra.mxu0 0.0
    %67 = vmatprep.subr.mxu0 0.0
    %68 = vmatpush2.msra.mxu0 0.0
    %69 = vmatprep.subr.mxu0 0.0
    %70 = vmatpush2.msra.mxu0 0.0
    %71 = vmatprep.subr.mxu0 0.0
    %72 = vmatpush2.msra.mxu0 0.0
    %73 = vmatprep.subr.mxu0 0.0
    %74 = vmatpush2.msra.mxu0 0.0
    %75 = vmatprep.subr.mxu0 0.0
    %76 = vmatpush2.msra.mxu0 0.0
    %77 = vmatprep.subr.mxu0 0.0
    %78 = vmatpush2.msra.mxu0 0.0
    %79 = vmatprep.subr.mxu0 0.0
    %80 = vmatpush2.msra.mxu0 0.0
    %81 = vmatprep.subr.mxu0 0.0
    %82 = vmatpush2.msra.mxu0 0.0
    %83 = vmatprep.subr.mxu0 0.0
    %84 = vmatpush2.msra.mxu0 0.0
    %85 = vmatprep.subr.mxu0 0.0
    %86 = vmatpush2.msra.mxu0 0.0
    %87 = vmatprep.subr.mxu0 0.0
    %88 = vmatpush2.msra.mxu0 0.0
    %89 = vmatprep.subr.mxu0 0.0
    %90 = vmatpush2.msra.mxu0 0.0
    %91 = vmatprep.subr.mxu0 0.0
    %92 = vmatpush2.msra.mxu0 0.0
    %93 = vmatprep.subr.mxu0 0.0
    %94 = vmatpush2.msra.mxu0 0.0
    %95 = vmatprep.mubr.f32.mxu0 0.0
    %96 = vmatmul.mubr.f32.gmra.mxu0 %v29
    %v97 = vpop.f32.mrf.mxu0
    %v98 = vadd.f32 %v25, %v97
    %v99 = vpop.f32.mrf.mxu0
    %100 = vdwg.mxu0
    %vm101 = vcmask 130048
    %102 = vst.msk [vmem:[#allocation2] sm:$0xff] %vm101, %v98
    // Predicated region
    $region14: #{tpu_custom_call.1} parent=1 // pred_check
      _
    $region15: #{tpu_custom_call.1} parent=1 // pred_check_branch
      %104 = sbr.rel (0) target = $region17
    $region16: #{tpu_custom_call.1} parent=1 // pred_region
      %s106 = ssub.s32 128, 32
      %107 = vsyncadd [#allocation3], %s106
      %s108 = sshll.u32 [#allocation2], 4
      %s109 = int_to_ptr.vmem [resolvable:$true] %s108
      %114 = dma.vmem_to_hbm [thread:$0]  %s109, 32, %s3, [#allocation3], 32, 32, 2
    $region17: #{tpu_custom_call.1} parent=1 // pred_fallthru
      _
    // Predicated region
    $region18: #{tpu_custom_call.1} parent=1 // pred_check
      _
    $region19: #{tpu_custom_call.1} parent=1 // pred_check_branch
      %116 = sbr.rel (0) target = $region21
    $region20: #{tpu_custom_call.1} parent=1 // pred_region
      %117 = dma.done [#allocation3], 128
    $region21: #{tpu_custom_call.1} parent=1 // pred_fallthru
      _
    %118 = vsyncpa [#allocation3], 1

</llo_original>
